<compile_context>
chip_gen: v6e
topology: v6e:2x2x1
jax: 0.10.0
libtpu: 0.0.40
codegen_flags: <defaults>
</compile_context>

<pallas_src>
import numpy as np
import jax
import jax.numpy as jnp
from jax.experimental import pallas as pl
from jax.experimental.pallas import tpu as pltpu

_LANE = 128
_SUBLANE = 8


def _round_up(n, m):
    return ((n + m - 1) // m) * m


# ----------------------------------------------------------------------------- kernel
def made_kernel(x_ref, w0_ref, b0_ref, w1_ref, b1_ref, wo_ref, bo_ref, out_ref):
    """One batch tile of the fused MADE forward.

    Weights are pre-masked, pre-transposed to (in, out), zero-padded lane-dense, and the
    output / direct-skip layers are fused into one resident [w2; wd] block. All matmuls
    run with bf16 (or f32) operands and f32 accumulation on the MXU.
    """
    cdt = w0_ref.dtype                  # compute dtype for MXU operands (bf16 or f32)
    h1_p = w1_ref.shape[1]              # static: row split of the fused [w2; wd] block

    x = x_ref[...]                      # keep native dtype — no f32 upcast before the MXU

    # hidden layer 0: (pre-masked) Linear + bias + ReLU
    h = jnp.dot(x, w0_ref[...], preferred_element_type=jnp.float32) + b0_ref[...]
    h = jnp.maximum(h, 0.0).astype(cdt)

    # hidden layer 1: (pre-masked) Linear + bias + ReLU
    h = jnp.dot(h, w1_ref[...], preferred_element_type=jnp.float32) + b1_ref[...]
    h = jnp.maximum(h, 0.0).astype(cdt)

    # fused (output MaskedLinear + direct MaskedLinear): two accumulated dots over
    # static slices of the resident wo block — no in-kernel concat buffer.
    y = jnp.dot(h, wo_ref[:h1_p, :], preferred_element_type=jnp.float32)
    y = y + jnp.dot(x, wo_ref[h1_p:, :], preferred_element_type=jnp.float32)
    y = y + bo_ref[...]

    out_ref[...] = y.astype(out_ref.dtype)


# --------------------------------------------------------------------------- packing
def pack_params(params, param_dtype=jnp.bfloat16):
    """One-time glue (outside the hot path): fold masks into weights, transpose
    (out,in)->(in,out), zero-pad feature dims to 128 lanes, fuse output+direct weights
    and biases. Weights default to bf16 (native MXU mode on v6e/v7x, half the DMA/VMEM);
    biases stay f32 (added to the f32 accumulator)."""
    in_dim = int(params["wd"].shape[0])
    h0 = int(params["w0"].shape[0])
    h1 = int(params["w1"].shape[0])

    in_p = _round_up(in_dim, _LANE)
    h0_p = _round_up(h0, _LANE)
    h1_p = _round_up(h1, _LANE)

    def fold_t(w, m):  # masked weight, transposed to (in, out)
        return (np.asarray(m, np.float32) * np.asarray(w, np.float32)).T

    def pad2(a, rows, cols):
        out = np.zeros((rows, cols), np.float32)
        out[: a.shape[0], : a.shape[1]] = a
        return out

    def pad_bias(b, cols):
        out = np.zeros((1, cols), np.float32)
        out[0, : b.shape[0]] = np.asarray(b, np.float32)
        return out

    w0 = pad2(fold_t(params["w0"], params["m0"]), in_p, h0_p)
    b0 = pad_bias(params["b0"], h0_p)
    w1 = pad2(fold_t(params["w1"], params["m1"]), h0_p, h1_p)
    b1 = pad_bias(params["b1"], h1_p)

    w2 = pad2(fold_t(params["w2"], params["m2"]), h1_p, in_p)   # output layer
    wd = pad2(fold_t(params["wd"], params["md"]), in_p, in_p)   # direct skip
    wo = np.concatenate([w2, wd], axis=0)                       # (h1_p + in_p, in_p)
    bo = pad_bias(np.asarray(params["b2"]) + np.asarray(params["bd"]), in_p)

    to = lambda a: jnp.asarray(a, param_dtype)
    return dict(
        in_dim=in_dim, in_p=in_p, h0_p=h0_p, h1_p=h1_p,
        w0=to(w0), b0=jnp.asarray(b0, jnp.float32),
        w1=to(w1), b1=jnp.asarray(b1, jnp.float32),
        wo=to(wo), bo=jnp.asarray(bo, jnp.float32),
    )


# --------------------------------------------------------------------------- wrapper
def made_forward(x, packed, *, block_b=256, out_dtype=jnp.float32):
    """Fused MADE forward. `out_dtype=jnp.bfloat16` halves output HBM writeback on
    v6e/v7x if the consumer tolerates it (keep f32 on v5e)."""
    B, in_dim = x.shape
    assert in_dim == packed["in_dim"]
    in_p, h0_p, h1_p = packed["in_p"], packed["h0_p"], packed["h1_p"]
    wdt = packed["w0"].dtype

    # --- batch tiling: large lane-dense tiles; >= 2 tiles when possible so the
    #     "parallel" batch axis engages both v7x TensorCores (neutral on v5e/v6e).
    b_al = _round_up(B, _SUBLANE)
    n_tiles = pl.cdiv(b_al, block_b)
    if n_tiles == 1 and b_al >= 2 * _SUBLANE:
        n_tiles = 2
    tb = _round_up(pl.cdiv(b_al, n_tiles), _SUBLANE)
    b_pad = tb * n_tiles

    # --- activation prep: cast / pad only when actually needed (no gratuitous copies).
    xw = x if x.dtype == wdt else x.astype(wdt)
    needs_pad = (b_pad != B) or (in_p != in_dim)
    if needs_pad:
        xw = jnp.pad(xw, ((0, b_pad - B), (0, in_p - in_dim)))

    param_arrays = (packed["w0"], packed["b0"], packed["w1"], packed["b1"],
                    packed["wo"], packed["bo"])
    weight_bytes = sum(int(a.size) * a.dtype.itemsize for a in param_arrays)

    flops = 2 * b_pad * (in_p * h0_p + h0_p * h1_p + (h1_p + in_p) * in_p)
    bytes_accessed = (int(xw.size) * xw.dtype.itemsize
                      + weight_bytes
                      + b_pad * in_p * jnp.dtype(out_dtype).itemsize)

    const = lambda i: (0, 0)

    def _run(single_buffer_weights):
        if single_buffer_weights:
            # Constant index map -> block never changes; single-buffer to halve
            # resident weight VMEM (decisive on v7x's 64 MiB once hidden sizes grow).
            wspec = lambda shape: pl.BlockSpec(shape, const,
                                               pipeline_mode=pl.Buffered(1))
        else:
            wspec = lambda shape: pl.BlockSpec(shape, const)

        in_specs = [
            pl.BlockSpec((tb, in_p), lambda i: (i, 0)),     # x tile (per grid step)
            wspec((in_p, h0_p)), wspec((1, h0_p)),          # w0, b0 (VMEM-resident)
            wspec((h0_p, h1_p)), wspec((1, h1_p)),          # w1, b1
            wspec((h1_p + in_p, in_p)), wspec((1, in_p)),   # fused [w2; wd], b2 + bd
        ]
        out_spec = pl.BlockSpec((tb, in_p), lambda i: (i, 0))

        # Explicit VMEM budget: weights x buffer_count + double-buffered x/out tiles
        # + f32 intermediates, with headroom. Capped below physical VMEM.
        wbuf = 1 if single_buffer_weights else 2
        act_bytes = 2 * tb * in_p * (xw.dtype.itemsize + jnp.dtype(out_dtype).itemsize)
        interm_bytes = tb * (h0_p + h1_p + in_p) * 4
        vmem_limit = int(min(max(wbuf * weight_bytes + act_bytes + interm_bytes
                                 + (8 << 20), 32 << 20), 100 << 20))

        return pl.pallas_call(
            made_kernel,
            out_shape=jax.ShapeDtypeStruct((b_pad, in_p), out_dtype),
            grid=(b_pad // tb,),
            in_specs=in_specs,
            out_specs=out_spec,
            compiler_params=pltpu.CompilerParams(
                dimension_semantics=("parallel",),
                vmem_limit_bytes=vmem_limit),
            cost_estimate=pl.CostEstimate(flops=flops, transcendentals=0,
                                          bytes_accessed=bytes_accessed),
        )(xw, *param_arrays)

    try:
        out = _run(True)          # preferred: single-buffered constant weight blocks
    except Exception:             # fallback if this jax build rejects Buffered(1)
        out = _run(False)

    if needs_pad:
        out = out[:B, :in_dim]
    return out


# ------------------------------------------------------------------ parameter builder
def build_made_params(in_dim, hidden_sz, seed=0):
    """Deterministically build MADE masks (exactly as the PyTorch __init__ with
    m_first=None, shuffle_m=False) and random weights."""
    rng = np.random.RandomState(seed)

    m = {}
    m[-1] = np.arange(in_dim)
    for i in range(len(hidden_sz)):
        prev_min = int(np.min(m[i - 1]))
        m[i] = rng.randint(prev_min, in_dim - 1, size=hidden_sz[i])

    masks = [m[i - 1][:, None] <= m[i][None, :] for i in range(len(hidden_sz))]
    masks += [m[len(hidden_sz) - 1][:, None] < m[-1][None, :]]
    layer_masks = [mk.T.astype(np.float32) for mk in masks]          # (out, in)
    direct_mask = (m[-1][:, None] > m[-1][None, :]).astype(np.float32)

    hs = [in_dim] + list(hidden_sz) + [in_dim]
    key = jax.random.PRNGKey(seed)
    params = {}
    for li, name in enumerate(["0", "1", "2"]):
        fan_in, fan_out = hs[li], hs[li + 1]
        key, kw, kb = jax.random.split(key, 3)
        bound = 1.0 / np.sqrt(fan_in)
        params["w" + name] = jax.random.uniform(kw, (fan_out, fan_in),
                                                jnp.float32, -bound, bound)
        params["b" + name] = jax.random.uniform(kb, (fan_out,),
                                                jnp.float32, -bound, bound)
        params["m" + name] = jnp.asarray(layer_masks[li])

    key, kw, kb = jax.random.split(key, 3)
    bound = 1.0 / np.sqrt(in_dim)
    params["wd"] = jax.random.uniform(kw, (in_dim, in_dim), jnp.float32, -bound, bound)
    params["bd"] = jax.random.uniform(kb, (in_dim,), jnp.float32, -bound, bound)
    params["md"] = jnp.asarray(direct_mask)
    return params


def made_forward_ref(x, params):
    """Pure-JAX reference reproducing the PyTorch forward semantics."""
    def lin(h, w, m, b):
        return h @ (m * w).T + b

    h = jax.nn.relu(lin(x, params["w0"], params["m0"], params["b0"]))
    h = jax.nn.relu(lin(h, params["w1"], params["m1"], params["b1"]))
    y = lin(h, params["w2"], params["m2"], params["b2"])
    d = lin(x, params["wd"], params["md"], params["bd"])
    return d + y


if __name__ == "__main__":
    in_dim = 16
    hidden_sz = [32, 32]
    batch = 8

    params = build_made_params(in_dim, hidden_sz, seed=0)

    key = jax.random.PRNGKey(0)
    x = jax.random.uniform(key, (batch, in_dim), jnp.float32)
    ref = made_forward_ref(x, params)

    # exact path: f32 weights, tight tolerance
    packed_f32 = pack_params(params, param_dtype=jnp.float32)
    out_f32 = jax.block_until_ready(made_forward(x, packed_f32))
    np.testing.assert_allclose(np.asarray(out_f32), np.asarray(ref),
                               rtol=1e-5, atol=1e-5)

    # fast path (default): bf16 weights + bf16 MXU operands, f32 accumulation
    packed = pack_params(params)
    out = jax.block_until_ready(made_forward(x, packed))
    assert out.shape == (batch, in_dim)
    np.testing.assert_allclose(np.asarray(out), np.asarray(ref),
                               rtol=3e-2, atol=3e-2)

    # TODO(synk): log_prob / sample from the PyTorch module are host-side loops around
    # forward() and are intentionally not part of the kernel.
    print("KERNEL_OK")
</pallas_src>

<mosaic_0001>
module attributes {stable_mosaic.version = 11 : i64} {
  func.func @made_kernel(%arg0: i32, %arg1: memref<8x128xf32, #tpu.memory_space<vmem>>, %arg2: memref<128x128xf32, #tpu.memory_space<vmem>>, %arg3: memref<1x128xf32, #tpu.memory_space<vmem>>, %arg4: memref<128x128xf32, #tpu.memory_space<vmem>>, %arg5: memref<1x128xf32, #tpu.memory_space<vmem>>, %arg6: memref<256x128xf32, #tpu.memory_space<vmem>>, %arg7: memref<1x128xf32, #tpu.memory_space<vmem>>, %arg8: memref<8x128xf32, #tpu.memory_space<vmem>>) attributes {dimension_semantics = [#tpu.dimension_semantics<parallel>], iteration_bounds = array<i64: 1>, scalar_prefetch = 0 : i64, scratch_operands = 0 : i64, tpu.core_type = #tpu.core_type<tc>, window_params = [{transform_indices = @transform_0, window_bounds = array<i64: 8, 128>}, {pipeline_mode = #tpu.pipeline_mode<synchronous>, transform_indices = @transform_1, window_bounds = array<i64: 128, 128>}, {pipeline_mode = #tpu.pipeline_mode<synchronous>, transform_indices = @transform_2, window_bounds = array<i64: 1, 128>}, {pipeline_mode = #tpu.pipeline_mode<synchronous>, transform_indices = @transform_3, window_bounds = array<i64: 128, 128>}, {pipeline_mode = #tpu.pipeline_mode<synchronous>, transform_indices = @transform_4, window_bounds = array<i64: 1, 128>}, {pipeline_mode = #tpu.pipeline_mode<synchronous>, transform_indices = @transform_5, window_bounds = array<i64: 256, 128>}, {pipeline_mode = #tpu.pipeline_mode<synchronous>, transform_indices = @transform_6, window_bounds = array<i64: 1, 128>}, {transform_indices = @transform_7, window_bounds = array<i64: 8, 128>}]} {
    %c0 = arith.constant 0 : index
    %c0_0 = arith.constant 0 : index
    %0 = vector.load %arg1[%c0, %c0_0] : memref<8x128xf32, #tpu.memory_space<vmem>>, vector<8x128xf32>
    %c0_1 = arith.constant 0 : index
    %c0_2 = arith.constant 0 : index
    %1 = vector.load %arg2[%c0_1, %c0_2] : memref<128x128xf32, #tpu.memory_space<vmem>>, vector<128x128xf32>
    %cst = arith.constant dense<0.000000e+00> : vector<8x128xf32>
    %2 = tpu.matmul %0, %1, %cst {dimension_numbers = #tpu.dot_dimension_numbers<[1], [0], [0], [1], [0, 0, 1, 1], [], []>} : vector<8x128xf32>, vector<128x128xf32>, vector<8x128xf32> -> vector<8x128xf32>
    %c0_3 = arith.constant 0 : index
    %c0_4 = arith.constant 0 : index
    %3 = vector.load %arg3[%c0_3, %c0_4] : memref<1x128xf32, #tpu.memory_space<vmem>>, vector<1x128xf32>
    %4 = vector.broadcast %3 : vector<1x128xf32> to vector<8x128xf32>
    %5 = arith.addf %2, %4 : vector<8x128xf32>
    %cst_5 = arith.constant 0.000000e+00 : f32
    %6 = vector.broadcast %cst_5 : f32 to vector<8x128xf32>
    %7 = arith.maximumf %5, %6 : vector<8x128xf32>
    %c0_6 = arith.constant 0 : index
    %c0_7 = arith.constant 0 : index
    %8 = vector.load %arg4[%c0_6, %c0_7] : memref<128x128xf32, #tpu.memory_space<vmem>>, vector<128x128xf32>
    %cst_8 = arith.constant dense<0.000000e+00> : vector<8x128xf32>
    %9 = tpu.matmul %7, %8, %cst_8 {dimension_numbers = #tpu.dot_dimension_numbers<[1], [0], [0], [1], [0, 0, 1, 1], [], []>} : vector<8x128xf32>, vector<128x128xf32>, vector<8x128xf32> -> vector<8x128xf32>
    %c0_9 = arith.constant 0 : index
    %c0_10 = arith.constant 0 : index
    %10 = vector.load %arg5[%c0_9, %c0_10] : memref<1x128xf32, #tpu.memory_space<vmem>>, vector<1x128xf32>
    %11 = vector.broadcast %10 : vector<1x128xf32> to vector<8x128xf32>
    %12 = arith.addf %9, %11 : vector<8x128xf32>
    %cst_11 = arith.constant 0.000000e+00 : f32
    %13 = vector.broadcast %cst_11 : f32 to vector<8x128xf32>
    %14 = arith.maximumf %12, %13 : vector<8x128xf32>
    %c0_12 = arith.constant 0 : index
    %c0_13 = arith.constant 0 : index
    %15 = vector.load %arg6[%c0_12, %c0_13] : memref<256x128xf32, #tpu.memory_space<vmem>>, vector<128x128xf32>
    %cst_14 = arith.constant dense<0.000000e+00> : vector<8x128xf32>
    %16 = tpu.matmul %14, %15, %cst_14 {dimension_numbers = #tpu.dot_dimension_numbers<[1], [0], [0], [1], [0, 0, 1, 1], [], []>} : vector<8x128xf32>, vector<128x128xf32>, vector<8x128xf32> -> vector<8x128xf32>
    %c128 = arith.constant 128 : index
    %c0_15 = arith.constant 0 : index
    %17 = vector.load %arg6[%c128, %c0_15] : memref<256x128xf32, #tpu.memory_space<vmem>>, vector<128x128xf32>
    %cst_16 = arith.constant dense<0.000000e+00> : vector<8x128xf32>
    %18 = tpu.matmul %0, %17, %cst_16 {dimension_numbers = #tpu.dot_dimension_numbers<[1], [0], [0], [1], [0, 0, 1, 1], [], []>} : vector<8x128xf32>, vector<128x128xf32>, vector<8x128xf32> -> vector<8x128xf32>
    %19 = arith.addf %16, %18 : vector<8x128xf32>
    %c0_17 = arith.constant 0 : index
    %c0_18 = arith.constant 0 : index
    %20 = vector.load %arg7[%c0_17, %c0_18] : memref<1x128xf32, #tpu.memory_space<vmem>>, vector<1x128xf32>
    %21 = vector.broadcast %20 : vector<1x128xf32> to vector<8x128xf32>
    %22 = arith.addf %19, %21 : vector<8x128xf32>
    %c0_19 = arith.constant 0 : index
    %c0_20 = arith.constant 0 : index
    %23 = vector.load %arg8[%c0_19, %c0_20] : memref<8x128xf32, #tpu.memory_space<vmem>>, vector<8x128xf32>
    tpu.vector_store %arg8[%c0_19, %c0_20], %22 {strides = array<i32>} : memref<8x128xf32, #tpu.memory_space<vmem>>, vector<8x128xf32>,
    return
  }
  func.func @transform_0(%arg0: i32) -> (i32, i32) {
    %c0_i32 = arith.constant 0 : i32
    %c0_i32_0 = arith.constant 0 : i32
    return %arg0, %c0_i32 : i32, i32
  }
  func.func @transform_1(%arg0: i32) -> (i32, i32) {
    %c0_i32 = arith.constant 0 : i32
    %c0_i32_0 = arith.constant 0 : i32
    %c0_i32_1 = arith.constant 0 : i32
    return %c0_i32, %c0_i32_0 : i32, i32
  }
  func.func @transform_2(%arg0: i32) -> (i32, i32) {
    %c0_i32 = arith.constant 0 : i32
    %c0_i32_0 = arith.constant 0 : i32
    %c0_i32_1 = arith.constant 0 : i32
    return %c0_i32, %c0_i32_0 : i32, i32
  }
  func.func @transform_3(%arg0: i32) -> (i32, i32) {
    %c0_i32 = arith.constant 0 : i32
    %c0_i32_0 = arith.constant 0 : i32
    %c0_i32_1 = arith.constant 0 : i32
    return %c0_i32, %c0_i32_0 : i32, i32
  }
  func.func @transform_4(%arg0: i32) -> (i32, i32) {
    %c0_i32 = arith.constant 0 : i32
    %c0_i32_0 = arith.constant 0 : i32
    %c0_i32_1 = arith.constant 0 : i32
    return %c0_i32, %c0_i32_0 : i32, i32
  }
  func.func @transform_5(%arg0: i32) -> (i32, i32) {
    %c0_i32 = arith.constant 0 : i32
    %c0_i32_0 = arith.constant 0 : i32
    %c0_i32_1 = arith.constant 0 : i32
    return %c0_i32, %c0_i32_0 : i32, i32
  }
  func.func @transform_6(%arg0: i32) -> (i32, i32) {
    %c0_i32 = arith.constant 0 : i32
    %c0_i32_0 = arith.constant 0 : i32
    %c0_i32_1 = arith.constant 0 : i32
    return %c0_i32, %c0_i32_0 : i32, i32
  }
  func.func @transform_7(%arg0: i32) -> (i32, i32) {
    %c0_i32 = arith.constant 0 : i32
    %c0_i32_0 = arith.constant 0 : i32
    return %arg0, %c0_i32 : i32, i32
  }
}

module attributes {stable_mosaic.version = 11 : i64} {
  func.func @made_kernel(%arg0: i32, %arg1: memref<8x128xf32, #tpu.memory_space<vmem>>, %arg2: memref<128x128xf32, #tpu.memory_space<vmem>>, %arg3: memref<1x128xf32, #tpu.memory_space<vmem>>, %arg4: memref<128x128xf32, #tpu.memory_space<vmem>>, %arg5: memref<1x128xf32, #tpu.memory_space<vmem>>, %arg6: memref<256x128xf32, #tpu.memory_space<vmem>>, %arg7: memref<1x128xf32, #tpu.memory_space<vmem>>, %arg8: memref<8x128xf32, #tpu.memory_space<vmem>>) attributes {dimension_semantics = [#tpu.dimension_semantics<parallel>], iteration_bounds = array<i64: 1>, scalar_prefetch = 0 : i64, scratch_operands = 0 : i64, tpu.core_type = #tpu.core_type<tc>, window_params = [{transform_indices = @transform_0, window_bounds = array<i64: 8, 128>}, {pipeline_mode = #tpu.pipeline_mode<synchronous>, transform_indices = @transform_1, window_bounds = array<i64: 128, 128>}, {pipeline_mode = #tpu.pipeline_mode<synchronous>, transform_indices = @transform_2, window_bounds = array<i64: 1, 128>}, {pipeline_mode = #tpu.pipeline_mode<synchronous>, transform_indices = @transform_3, window_bounds = array<i64: 128, 128>}, {pipeline_mode = #tpu.pipeline_mode<synchronous>, transform_indices = @transform_4, window_bounds = array<i64: 1, 128>}, {pipeline_mode = #tpu.pipeline_mode<synchronous>, transform_indices = @transform_5, window_bounds = array<i64: 256, 128>}, {pipeline_mode = #tpu.pipeline_mode<synchronous>, transform_indices = @transform_6, window_bounds = array<i64: 1, 128>}, {transform_indices = @transform_7, window_bounds = array<i64: 8, 128>}]} {
    %c0 = arith.constant 0 : index
    %c0_0 = arith.constant 0 : index
    %0 = vector.load %arg1[%c0, %c0_0] : memref<8x128xf32, #tpu.memory_space<vmem>>, vector<8x128xf32>
    %c0_1 = arith.constant 0 : index
    %c0_2 = arith.constant 0 : index
    %1 = vector.load %arg2[%c0_1, %c0_2] : memref<128x128xf32, #tpu.memory_space<vmem>>, vector<128x128xf32>
    %cst = arith.constant dense<0.000000e+00> : vector<8x128xf32>
    %2 = tpu.matmul %0, %1, %cst {dimension_numbers = #tpu.dot_dimension_numbers<[1], [0], [0], [1], [0, 0, 1, 1], [], []>} : vector<8x128xf32>, vector<128x128xf32>, vector<8x128xf32> -> vector<8x128xf32>
    %c0_3 = arith.constant 0 : index
    %c0_4 = arith.constant 0 : index
    %3 = vector.load %arg3[%c0_3, %c0_4] : memref<1x128xf32, #tpu.memory_space<vmem>>, vector<1x128xf32>
    %4 = vector.broadcast %3 : vector<1x128xf32> to vector<8x128xf32>
    %5 = arith.addf %2, %4 : vector<8x128xf32>
    %cst_5 = arith.constant 0.000000e+00 : f32
    %6 = vector.broadcast %cst_5 : f32 to vector<8x128xf32>
    %7 = arith.maximumf %5, %6 : vector<8x128xf32>
    %c0_6 = arith.constant 0 : index
    %c0_7 = arith.constant 0 : index
    %8 = vector.load %arg4[%c0_6, %c0_7] : memref<128x128xf32, #tpu.memory_space<vmem>>, vector<128x128xf32>
    %cst_8 = arith.constant dense<0.000000e+00> : vector<8x128xf32>
    %9 = tpu.matmul %7, %8, %cst_8 {dimension_numbers = #tpu.dot_dimension_numbers<[1], [0], [0], [1], [0, 0, 1, 1], [], []>} : vector<8x128xf32>, vector<128x128xf32>, vector<8x128xf32> -> vector<8x128xf32>
    %c0_9 = arith.constant 0 : index
    %c0_10 = arith.constant 0 : index
    %10 = vector.load %arg5[%c0_9, %c0_10] : memref<1x128xf32, #tpu.memory_space<vmem>>, vector<1x128xf32>
    %11 = vector.broadcast %10 : vector<1x128xf32> to vector<8x128xf32>
    %12 = arith.addf %9, %11 : vector<8x128xf32>
    %cst_11 = arith.constant 0.000000e+00 : f32
    %13 = vector.broadcast %cst_11 : f32 to vector<8x128xf32>
    %14 = arith.maximumf %12, %13 : vector<8x128xf32>
    %c0_12 = arith.constant 0 : index
    %c0_13 = arith.constant 0 : index
    %15 = vector.load %arg6[%c0_12, %c0_13] : memref<256x128xf32, #tpu.memory_space<vmem>>, vector<128x128xf32>
    %cst_14 = arith.constant dense<0.000000e+00> : vector<8x128xf32>
    %16 = tpu.matmul %14, %15, %cst_14 {dimension_numbers = #tpu.dot_dimension_numbers<[1], [0], [0], [1], [0, 0, 1, 1], [], []>} : vector<8x128xf32>, vector<128x128xf32>, vector<8x128xf32> -> vector<8x128xf32>
    %c128 = arith.constant 128 : index
    %c0_15 = arith.constant 0 : index
    %17 = vector.load %arg6[%c128, %c0_15] : memref<256x128xf32, #tpu.memory_space<vmem>>, vector<128x128xf32>
    %cst_16 = arith.constant dense<0.000000e+00> : vector<8x128xf32>
    %18 = tpu.matmul %0, %17, %cst_16 {dimension_numbers = #tpu.dot_dimension_numbers<[1], [0], [0], [1], [0, 0, 1, 1], [], []>} : vector<8x128xf32>, vector<128x128xf32>, vector<8x128xf32> -> vector<8x128xf32>
    %19 = arith.addf %16, %18 : vector<8x128xf32>
    %c0_17 = arith.constant 0 : index
    %c0_18 = arith.constant 0 : index
    %20 = vector.load %arg7[%c0_17, %c0_18] : memref<1x128xf32, #tpu.memory_space<vmem>>, vector<1x128xf32>
    %21 = vector.broadcast %20 : vector<1x128xf32> to vector<8x128xf32>
    %22 = arith.addf %19, %21 : vector<8x128xf32>
    %c0_19 = arith.constant 0 : index
    %c0_20 = arith.constant 0 : index
    %23 = vector.load %arg8[%c0_19, %c0_20] : memref<8x128xf32, #tpu.memory_space<vmem>>, vector<8x128xf32>
    tpu.vector_store %arg8[%c0_19, %c0_20], %22 {strides = array<i32>} : memref<8x128xf32, #tpu.memory_space<vmem>>, vector<8x128xf32>,
    return
  }
  func.func @transform_0(%arg0: i32) -> (i32, i32) {
    %c0_i32 = arith.constant 0 : i32
    %c0_i32_0 = arith.constant 0 : i32
    return %arg0, %c0_i32 : i32, i32
  }
  func.func @transform_1(%arg0: i32) -> (i32, i32) {
    %c0_i32 = arith.constant 0 : i32
    %c0_i32_0 = arith.constant 0 : i32
    %c0_i32_1 = arith.constant 0 : i32
    return %c0_i32, %c0_i32_0 : i32, i32
  }
  func.func @transform_2(%arg0: i32) -> (i32, i32) {
    %c0_i32 = arith.constant 0 : i32
    %c0_i32_0 = arith.constant 0 : i32
    %c0_i32_1 = arith.constant 0 : i32
    return %c0_i32, %c0_i32_0 : i32, i32
  }
  func.func @transform_3(%arg0: i32) -> (i32, i32) {
    %c0_i32 = arith.constant 0 : i32
    %c0_i32_0 = arith.constant 0 : i32
    %c0_i32_1 = arith.constant 0 : i32
    return %c0_i32, %c0_i32_0 : i32, i32
  }
  func.func @transform_4(%arg0: i32) -> (i32, i32) {
    %c0_i32 = arith.constant 0 : i32
    %c0_i32_0 = arith.constant 0 : i32
    %c0_i32_1 = arith.constant 0 : i32
    return %c0_i32, %c0_i32_0 : i32, i32
  }
  func.func @transform_5(%arg0: i32) -> (i32, i32) {
    %c0_i32 = arith.constant 0 : i32
    %c0_i32_0 = arith.constant 0 : i32
    %c0_i32_1 = arith.constant 0 : i32
    return %c0_i32, %c0_i32_0 : i32, i32
  }
  func.func @transform_6(%arg0: i32) -> (i32, i32) {
    %c0_i32 = arith.constant 0 : i32
    %c0_i32_0 = arith.constant 0 : i32
    %c0_i32_1 = arith.constant 0 : i32
    return %c0_i32, %c0_i32_0 : i32, i32
  }
  func.func @transform_7(%arg0: i32) -> (i32, i32) {
    %c0_i32 = arith.constant 0 : i32
    %c0_i32_0 = arith.constant 0 : i32
    return %arg0, %c0_i32 : i32, i32
  }
}

</mosaic_0001>

<llo_original>
// kernel: tpu_custom_call.1
$region0: #{tpu_custom_call.1}
  #allocation0 [shape = 'u32[]', space=smem, size = 0x4, offset = 0x4, fixed_abs, tag = 'smem constant byte address 0x4 - core index']
  #allocation1 [shape = 'u32[144,128]{1,0:T(1,128)}', space=vmem, size = 0x12000, scoped, tag = 'internal scratch']
  %s0 = inlined_call_operand.hbm [shape: f32[8,128], index: 0, kind: input, shape index: {}]
  %s1 = inlined_call_operand.hbm [shape: f32[128,128], index: 1, kind: input, shape index: {}]
  %s2 = inlined_call_operand.vmem [shape: f32[1,128], index: 2, kind: input, shape index: {}]
  %s3 = inlined_call_operand.hbm [shape: f32[128,128], index: 3, kind: input, shape index: {}]
  %s4 = inlined_call_operand.vmem [shape: f32[1,128], index: 4, kind: input, shape index: {}]
  %s5 = inlined_call_operand.hbm [shape: f32[256,128], index: 5, kind: input, shape index: {}]
  %s6 = inlined_call_operand.vmem [shape: f32[1,128], index: 6, kind: input, shape index: {}]
  %s7 = inlined_call_operand.hbm [shape: f32[8,128], index: 7, kind: output, shape index: {}]
  %s8 = sld [smem:[#allocation0]]
  $region54: #{tpu_custom_call.1} parent=0
    _
  %s10 = ssub.s32 1, %s8
  %s11 = scalar_select 0, %s10, %s8
  $region1: #{tpu_custom_call.1} parent=0
    #allocation2 [shape = 'u8[4096]{0}', space=vmem, size = 0x1000, scoped, tag = 'input window, operand 0, single buffered']
    #allocation3 [shape = 's32[1]{0}', space=sflag, size = 0x4, scoped, tag = 'scoped memory for tpu_custom_call.1']
    #allocation4 [shape = 's32[1]{0}', space=sflag, size = 0x4, scoped, tag = 'scoped memory for tpu_custom_call.1']
    #allocation5 [shape = 'u8[65536]{0}', space=vmem, size = 0x10000, scoped, tag = 'input window, operand 1, single buffered']
    #allocation6 [shape = 's32[1]{0}', space=sflag, size = 0x4, scoped, tag = 'scoped memory for tpu_custom_call.1']
    #allocation7 [shape = 'u8[65536]{0}', space=vmem, size = 0x10000, scoped, tag = 'input window, operand 3, single buffered']
    #allocation8 [shape = 'u8[131072]{0}', space=vmem, size = 0x20000, scoped, tag = 'input window, operand 5, single buffered']
    #allocation9 [shape = 's32[1]{0}', space=sflag, size = 0x4, scoped, tag = 'scoped memory for tpu_custom_call.1']
    #allocation10 [shape = 'u8[4096]{0}', space=vmem, size = 0x1000, scoped, tag = 'output window, operand 0, single buffered']
    %12 = vsyncpa [#allocation3], 0
    %13 = vsyncpa [#allocation6], 0
    %14 = vsyncpa [#allocation9], 0
    %15 = vsyncpa [#allocation4], 0
    // Predicated region
    $region2: #{tpu_custom_call.1} parent=1 // pred_check
      _
    $region3: #{tpu_custom_call.1} parent=1 // pred_check_branch
      %17 = sbr.rel (0) target = $region5
    $region4: #{tpu_custom_call.1} parent=1 // pred_region
      %s19 = ssub.s32 128, 128
      %20 = vsyncadd [#allocation3], %s19
      %s22 = sshll.u32 [#allocation2], 4
      %s23 = int_to_ptr.vmem [resolvable:$true] %s22
      %25 = dma.hbm_to_vmem [thread:$0]  %s0, 128, %s23, [#allocation3]
    $region5: #{tpu_custom_call.1} parent=1 // pred_fallthru
      _
    // Predicated region
    $region6: #{tpu_custom_call.1} parent=1 // pred_check
      _
    $region7: #{tpu_custom_call.1} parent=1 // pred_check_branch
      %27 = sbr.rel (0) target = $region9
    $region8: #{tpu_custom_call.1} parent=1 // pred_region
      %s29 = ssub.s32 2048, 2048
      %30 = vsyncadd [#allocation6], %s29
      %s31 = sshll.u32 [#allocation5], 4
      %s32 = int_to_ptr.vmem [resolvable:$true] %s31
      %37 = dma.hbm_to_vmem [thread:$0]  %s1, 2048, %s32, [#allocation6], 128, 128, 8
    $region9: #{tpu_custom_call.1} parent=1 // pred_fallthru
      _
    // Predicated region
    $region10: #{tpu_custom_call.1} parent=1 // pred_check
      _
    $region11: #{tpu_custom_call.1} parent=1 // pred_check_branch
      %39 = sbr.rel (0) target = $region13
    $region12: #{tpu_custom_call.1} parent=1 // pred_region
      _
    $region13: #{tpu_custom_call.1} parent=1 // pred_fallthru
      _
    // Predicated region
    $region14: #{tpu_custom_call.1} parent=1 // pred_check
      _
    $region15: #{tpu_custom_call.1} parent=1 // pred_check_branch
      %41 = sbr.rel (0) target = $region17
    $region16: #{tpu_custom_call.1} parent=1 // pred_region
      %s43 = ssub.s32 2048, 2048
      %44 = vsyncadd [#allocation6], %s43
      %s45 = sshll.u32 [#allocation7], 4
      %s46 = int_to_ptr.vmem [resolvable:$true] %s45
      %51 = dma.hbm_to_vmem [thread:$0]  %s3, 2048, %s46, [#allocation6], 128, 128, 8
    $region17: #{tpu_custom_call.1} parent=1 // pred_fallthru
      _
    // Predicated region
    $region18: #{tpu_custom_call.1} parent=1 // pred_check
      _
    $region19: #{tpu_custom_call.1} parent=1 // pred_check_branch
      %53 = sbr.rel (0) target = $region21
    $region20: #{tpu_custom_call.1} parent=1 // pred_region
      _
    $region21: #{tpu_custom_call.1} parent=1 // pred_fallthru
      _
    // Predicated region
    $region22: #{tpu_custom_call.1} parent=1 // pred_check
      _
    $region23: #{tpu_custom_call.1} parent=1 // pred_check_branch
      %55 = sbr.rel (0) target = $region25
    $region24: #{tpu_custom_call.1} parent=1 // pred_region
      %s57 = ssub.s32 4096, 4096
      %58 = vsyncadd [#allocation9], %s57
      %s59 = sshll.u32 [#allocation8], 4
      %s60 = int_to_ptr.vmem [resolvable:$true] %s59
      %65 = dma.hbm_to_vmem [thread:$0]  %s5, 4096, %s60, [#allocation9], 128, 128, 8
    $region25: #{tpu_custom_call.1} parent=1 // pred_fallthru
      _
    // Predicated region
    $region26: #{tpu_custom_call.1} parent=1 // pred_check
      _
    $region27: #{tpu_custom_call.1} parent=1 // pred_check_branch
      %67 = sbr.rel (0) target = $region29
    $region28: #{tpu_custom_call.1} parent=1 // pred_region
      _
    $region29: #{tpu_custom_call.1} parent=1 // pred_fallthru
      _
    // Predicated region
    $region30: #{tpu_custom_call.1} parent=1 // pred_check
      _
    $region31: #{tpu_custom_call.1} parent=1 // pred_check_branch
      %69 = sbr.rel (0) target = $region33
    $region32: #{tpu_custom_call.1} parent=1 // pred_region
      %70 = dma.done [#allocation3], 128
    $region33: #{tpu_custom_call.1} parent=1 // pred_fallthru
      _
    // Predicated region
    $region34: #{tpu_custom_call.1} parent=1 // pred_check
      _
    $region35: #{tpu_custom_call.1} parent=1 // pred_check_branch
      %72 = sbr.rel (0) target = $region37
    $region36: #{tpu_custom_call.1} parent=1 // pred_region
      %73 = dma.done [#allocation6], 2048
    $region37: #{tpu_custom_call.1} parent=1 // pred_fallthru
      _
    // Predicated region
    $region38: #{tpu_custom_call.1} parent=1 // pred_check
      _
    $region39: #{tpu_custom_call.1} parent=1 // pred_check_branch
      %75 = sbr.rel (0) target = $region41
    $region40: #{tpu_custom_call.1} parent=1 // pred_region
      %76 = dma.done [#allocation6], 2048
    $region41: #{tpu_custom_call.1} parent=1 // pred_fallthru
      _
    // Predicated region
    $region42: #{tpu_custom_call.1} parent=1 // pred_check
      _
    $region43: #{tpu_custom_call.1} parent=1 // pred_check_branch
      %78 = sbr.rel (0) target = $region45
    $region44: #{tpu_custom_call.1} parent=1 // pred_region
      %79 = dma.done [#allocation9], 4096
    $region45: #{tpu_custom_call.1} parent=1 // pred_fallthru
      _
    %v80 = vld [vmem:[#allocation2] sm:$0xff]
    %v81 = vld [vmem:[#allocation5] sm:$0xff]
    %v82 = vld [vmem:[#allocation5 + $0x8] sm:$0xff]
    %v83 = vld [vmem:[#allocation5 + $0x10] sm:$0xff]
    %v84 = vld [vmem:[#allocation5 + $0x18] sm:$0xff]
    %v85 = vld [vmem:[#allocation5 + $0x20] sm:$0xff]
    %v86 = vld [vmem:[#allocation5 + $0x28] sm:$0xff]
    %v87 = vld [vmem:[#allocation5 + $0x30] sm:$0xff]
    %v88 = vld [vmem:[#allocation5 + $0x38] sm:$0xff]
    %v89 = vld [vmem:[#allocation5 + $0x40] sm:$0xff]
    %v90 = vld [vmem:[#allocation5 + $0x48] sm:$0xff]
    %v91 = vld [vmem:[#allocation5 + $0x50] sm:$0xff]
    %v92 = vld [vmem:[#allocation5 + $0x58] sm:$0xff]
    %v93 = vld [vmem:[#allocation5 + $0x60] sm:$0xff]
    %v94 = vld [vmem:[#allocation5 + $0x68] sm:$0xff]
    %v95 = vld [vmem:[#allocation5 + $0x70] sm:$0xff]
    %v96 = vld [vmem:[#allocation5 + $0x78] sm:$0xff]
    %v97 = vld [vmem:[%s2] sm:$0x1]
    %v99 = vlaneseq
    %v100 = vshrl.u32 %v99, 7
    %v101 = vsub.s32 0, %v100
    %v102 = vrot.slane %v97, %v101
    %104 = vmatprep.subr.mxu0 0.0
    %105 = vmatpush1.msra.mxu0 %v96
    %106 = vmatprep.subr.mxu0 0.0
    %107 = vmatpush1.msra.mxu0 %v95
    %108 = vmatprep.subr.mxu0 0.0
    %109 = vmatpush1.msra.mxu0 %v94
    %110 = vmatprep.subr.mxu0 0.0
    %111 = vmatpush1.msra.mxu0 %v93
    %112 = vmatprep.subr.mxu0 0.0
    %113 = vmatpush1.msra.mxu0 %v92
    %114 = vmatprep.subr.mxu0 0.0
    %115 = vmatpush1.msra.mxu0 %v91
    %116 = vmatprep.subr.mxu0 0.0
    %117 = vmatpush1.msra.mxu0 %v90
    %118 = vmatprep.subr.mxu0 0.0
    %119 = vmatpush1.msra.mxu0 %v89
    %120 = vmatprep.subr.mxu0 0.0
    %121 = vmatpush1.msra.mxu0 %v88
    %122 = vmatprep.subr.mxu0 0.0
    %123 = vmatpush1.msra.mxu0 %v87
    %124 = vmatprep.subr.mxu0 0.0
    %125 = vmatpush1.msra.mxu0 %v86
    %126 = vmatprep.subr.mxu0 0.0
    %127 = vmatpush1.msra.mxu0 %v85
    %128 = vmatprep.subr.mxu0 0.0
    %129 = vmatpush1.msra.mxu0 %v84
    %130 = vmatprep.subr.mxu0 0.0
    %131 = vmatpush1.msra.mxu0 %v83
    %132 = vmatprep.subr.mxu0 0.0
    %133 = vmatpush1.msra.mxu0 %v82
    %134 = vmatprep.subr.mxu0 0.0
    %135 = vmatpush1.msra.mxu0 %v81
    %136 = vmatprep.subr.mxu0 0.0
    %137 = vmatpush2.msra.mxu0 0.0
    %138 = vmatprep.subr.mxu0 0.0
    %139 = vmatpush2.msra.mxu0 0.0
    %140 = vmatprep.subr.mxu0 0.0
    %141 = vmatpush2.msra.mxu0 0.0
    %142 = vmatprep.subr.mxu0 0.0
    %143 = vmatpush2.msra.mxu0 0.0
    %144 = vmatprep.subr.mxu0 0.0
    %145 = vmatpush2.msra.mxu0 0.0
    %146 = vmatprep.subr.mxu0 0.0
    %147 = vmatpush2.msra.mxu0 0.0
    %148 = vmatprep.subr.mxu0 0.0
    %149 = vmatpush2.msra.mxu0 0.0
    %150 = vmatprep.subr.mxu0 0.0
    %151 = vmatpush2.msra.mxu0 0.0
    %152 = vmatprep.subr.mxu0 0.0
    %153 = vmatpush2.msra.mxu0 0.0
    %154 = vmatprep.subr.mxu0 0.0
    %155 = vmatpush2.msra.mxu0 0.0
    %156 = vmatprep.subr.mxu0 0.0
    %157 = vmatpush2.msra.mxu0 0.0
    %158 = vmatprep.subr.mxu0 0.0
    %159 = vmatpush2.msra.mxu0 0.0
    %160 = vmatprep.subr.mxu0 0.0
    %161 = vmatpush2.msra.mxu0 0.0
    %162 = vmatprep.subr.mxu0 0.0
    %163 = vmatpush2.msra.mxu0 0.0
    %164 = vmatprep.subr.mxu0 0.0
    %165 = vmatpush2.msra.mxu0 0.0
    %166 = vmatprep.subr.mxu0 0.0
    %167 = vmatpush2.msra.mxu0 0.0
    %168 = vmatprep.mubr.f32.mxu0 0.0
    %169 = vmatmul.mubr.f32.gmra.mxu0 %v80
    %v170 = vpop.f32.mrf.mxu0
    %v171 = vadd.f32 %v102, %v170
    %v172 = vpop.f32.mrf.mxu0
    %173 = vdwg.mxu0
    %v174 = vmax.f32 %v171, 0.0
    %v175 = vld [vmem:[#allocation7] sm:$0xff]
    %v176 = vld [vmem:[#allocation7 + $0x8] sm:$0xff]
    %v177 = vld [vmem:[#allocation7 + $0x10] sm:$0xff]
    %v178 = vld [vmem:[#allocation7 + $0x18] sm:$0xff]
    %v179 = vld [vmem:[#allocation7 + $0x20] sm:$0xff]
    %v180 = vld [vmem:[#allocation7 + $0x28] sm:$0xff]
    %v181 = vld [vmem:[#allocation7 + $0x30] sm:$0xff]
    %v182 = vld [vmem:[#allocation7 + $0x38] sm:$0xff]
    %v183 = vld [vmem:[#allocation7 + $0x40] sm:$0xff]
    %v184 = vld [vmem:[#allocation7 + $0x48] sm:$0xff]
    %v185 = vld [vmem:[#allocation7 + $0x50] sm:$0xff]
    %v186 = vld [vmem:[#allocation7 + $0x58] sm:$0xff]
    %v187 = vld [vmem:[#allocation7 + $0x60] sm:$0xff]
    %v188 = vld [vmem:[#allocation7 + $0x68] sm:$0xff]
    %v189 = vld [vmem:[#allocation7 + $0x70] sm:$0xff]
    %v190 = vld [vmem:[#allocation7 + $0x78] sm:$0xff]
    %v191 = vld [vmem:[%s4] sm:$0x1]
    %v193 = vlaneseq
    %v194 = vshrl.u32 %v193, 7
    %v195 = vsub.s32 0, %v194
    %v196 = vrot.slane %v191, %v195
    %198 = vmatprep.subr.mxu0 0.0
    %199 = vmatpush1.msra.mxu0 %v190
    %200 = vmatprep.subr.mxu0 0.0
    %201 = vmatpush1.msra.mxu0 %v189
    %202 = vmatprep.subr.mxu0 0.0
    %203 = vmatpush1.msra.mxu0 %v188
    %204 = vmatprep.subr.mxu0 0.0
    %205 = vmatpush1.msra.mxu0 %v187
    %206 = vmatprep.subr.mxu0 0.0
    %207 = vmatpush1.msra.mxu0 %v186
    %208 = vmatprep.subr.mxu0 0.0
    %209 = vmatpush1.msra.mxu0 %v185
    %210 = vmatprep.subr.mxu0 0.0
    %211 = vmatpush1.msra.mxu0 %v184
    %212 = vmatprep.subr.mxu0 0.0
    %213 = vmatpush1.msra.mxu0 %v183
    %214 = vmatprep.subr.mxu0 0.0
    %215 = vmatpush1.msra.mxu0 %v182
    %216 = vmatprep.subr.mxu0 0.0
    %217 = vmatpush1.msra.mxu0 %v181
    %218 = vmatprep.subr.mxu0 0.0
    %219 = vmatpush1.msra.mxu0 %v180
    %220 = vmatprep.subr.mxu0 0.0
    %221 = vmatpush1.msra.mxu0 %v179
    %222 = vmatprep.subr.mxu0 0.0
    %223 = vmatpush1.msra.mxu0 %v178
    %224 = vmatprep.subr.mxu0 0.0
    %225 = vmatpush1.msra.mxu0 %v177
    %226 = vmatprep.subr.mxu0 0.0
    %227 = vmatpush1.msra.mxu0 %v176
    %228 = vmatprep.subr.mxu0 0.0
    %229 = vmatpush1.msra.mxu0 %v175
    %230 = vmatprep.subr.mxu0 0.0
    %231 = vmatpush2.msra.mxu0 0.0
    %232 = vmatprep.subr.mxu0 0.0
    %233 = vmatpush2.msra.mxu0 0.0
    %234 = vmatprep.subr.mxu0 0.0
    %235 = vmatpush2.msra.mxu0 0.0
    %236 = vmatprep.subr.mxu0 0.0
    %237 = vmatpush2.msra.mxu0 0.0
    %238 = vmatprep.subr.mxu0 0.0
    %239 = vmatpush2.msra.mxu0 0.0
    %240 = vmatprep.subr.mxu0 0.0
    %241 = vmatpush2.msra.mxu0 0.0
    %242 = vmatprep.subr.mxu0 0.0
    %243 = vmatpush2.msra.mxu0 0.0
    %244 = vmatprep.subr.mxu0 0.0
    %245 = vmatpush2.msra.mxu0 0.0
    %246 = vmatprep.subr.mxu0 0.0
    %247 = vmatpush2.msra.mxu0 0.0
    %248 = vmatprep.subr.mxu0 0.0
    %249 = vmatpush2.msra.mxu0 0.0
    %250 = vmatprep.subr.mxu0 0.0
    %251 = vmatpush2.msra.mxu0 0.0
    %252 = vmatprep.subr.mxu0 0.0
    %253 = vmatpush2.msra.mxu0 0.0
    %254 = vmatprep.subr.mxu0 0.0
    %255 = vmatpush2.msra.mxu0 0.0
    %256 = vmatprep.subr.mxu0 0.0
    %257 = vmatpush2.msra.mxu0 0.0
    %258 = vmatprep.subr.mxu0 0.0
    %259 = vmatpush2.msra.mxu0 0.0
    %260 = vmatprep.subr.mxu0 0.0
    %261 = vmatpush2.msra.mxu0 0.0
    %262 = vmatprep.mubr.f32.mxu0 0.0
    %263 = vmatmul.mubr.f32.gmra.mxu0 %v174
    %v264 = vpop.f32.mrf.mxu0
    %v265 = vadd.f32 %v196, %v264
    %v266 = vpop.f32.mrf.mxu0
    %267 = vdwg.mxu0
    %v268 = vmax.f32 %v265, 0.0
    %v269 = vld [vmem:[#allocation8] sm:$0xff]
    %v270 = vld [vmem:[#allocation8 + $0x8] sm:$0xff]
    %v271 = vld [vmem:[#allocation8 + $0x10] sm:$0xff]
    %v272 = vld [vmem:[#allocation8 + $0x18] sm:$0xff]
    %v273 = vld [vmem:[#allocation8 + $0x20] sm:$0xff]
    %v274 = vld [vmem:[#allocation8 + $0x28] sm:$0xff]
    %v275 = vld [vmem:[#allocation8 + $0x30] sm:$0xff]
    %v276 = vld [vmem:[#allocation8 + $0x38] sm:$0xff]
    %v277 = vld [vmem:[#allocation8 + $0x40] sm:$0xff]
    %v278 = vld [vmem:[#allocation8 + $0x48] sm:$0xff]
    %v279 = vld [vmem:[#allocation8 + $0x50] sm:$0xff]
    %v280 = vld [vmem:[#allocation8 + $0x58] sm:$0xff]
    %v281 = vld [vmem:[#allocation8 + $0x60] sm:$0xff]
    %v282 = vld [vmem:[#allocation8 + $0x68] sm:$0xff]
    %v283 = vld [vmem:[#allocation8 + $0x70] sm:$0xff]
    %v284 = vld [vmem:[#allocation8 + $0x78] sm:$0xff]
    %v285 = vld [vmem:[#allocation8 + $0x80] sm:$0xff]
    %v286 = vld [vmem:[#allocation8 + $0x88] sm:$0xff]
    %v287 = vld [vmem:[#allocation8 + $0x90] sm:$0xff]
    %v288 = vld [vmem:[#allocation8 + $0x98] sm:$0xff]
    %v289 = vld [vmem:[#allocation8 + $0xa0] sm:$0xff]
    %v290 = vld [vmem:[#allocation8 + $0xa8] sm:$0xff]
    %v291 = vld [vmem:[#allocation8 + $0xb0] sm:$0xff]
    %v292 = vld [vmem:[#allocation8 + $0xb8] sm:$0xff]
    %v293 = vld [vmem:[#allocation8 + $0xc0] sm:$0xff]
    %v294 = vld [vmem:[#allocation8 + $0xc8] sm:$0xff]
    %v295 = vld [vmem:[#allocation8 + $0xd0] sm:$0xff]
    %v296 = vld [vmem:[#allocation8 + $0xd8] sm:$0xff]
    %v297 = vld [vmem:[#allocation8 + $0xe0] sm:$0xff]
    %v298 = vld [vmem:[#allocation8 + $0xe8] sm:$0xff]
    %v299 = vld [vmem:[#allocation8 + $0xf0] sm:$0xff]
    %v300 = vld [vmem:[#allocation8 + $0xf8] sm:$0xff]
    %301 = vmatprep.subr.mxu0 0.0
    %302 = vmatpush1.msra.mxu0 %v300
    %303 = vmatprep.subr.mxu0 0.0
    %304 = vmatpush1.msra.mxu0 %v299
    %305 = vmatprep.subr.mxu0 0.0
    %306 = vmatpush1.msra.mxu0 %v298
    %307 = vmatprep.subr.mxu0 0.0
    %308 = vmatpush1.msra.mxu0 %v297
    %309 = vmatprep.subr.mxu0 0.0
    %310 = vmatpush1.msra.mxu0 %v296
    %311 = vmatprep.subr.mxu0 0.0
    %312 = vmatpush1.msra.mxu0 %v295
    %313 = vmatprep.subr.mxu0 0.0
    %314 = vmatpush1.msra.mxu0 %v294
    %315 = vmatprep.subr.mxu0 0.0
    %316 = vmatpush1.msra.mxu0 %v293
    %317 = vmatprep.subr.mxu0 0.0
    %318 = vmatpush1.msra.mxu0 %v292
    %319 = vmatprep.subr.mxu0 0.0
    %320 = vmatpush1.msra.mxu0 %v291
    %321 = vmatprep.subr.mxu0 0.0
    %322 = vmatpush1.msra.mxu0 %v290
    %323 = vmatprep.subr.mxu0 0.0
    %324 = vmatpush1.msra.mxu0 %v289
    %325 = vmatprep.subr.mxu0 0.0
    %326 = vmatpush1.msra.mxu0 %v288
    %327 = vmatprep.subr.mxu0 0.0
    %328 = vmatpush1.msra.mxu0 %v287
    %329 = vmatprep.subr.mxu0 0.0
    %330 = vmatpush1.msra.mxu0 %v286
    %331 = vmatprep.subr.mxu0 0.0
    %332 = vmatpush1.msra.mxu0 %v285
    %333 = vmatprep.subr.mxu0 0.0
    %334 = vmatpush2.msra.mxu0 0.0
    %335 = vmatprep.subr.mxu0 0.0
    %336 = vmatpush2.msra.mxu0 0.0
    %337 = vmatprep.subr.mxu0 0.0
    %338 = vmatpush2.msra.mxu0 0.0
    %339 = vmatprep.subr.mxu0 0.0
    %340 = vmatpush2.msra.mxu0 0.0
    %341 = vmatprep.subr.mxu0 0.0
    %342 = vmatpush2.msra.mxu0 0.0
    %343 = vmatprep.subr.mxu0 0.0
    %344 = vmatpush2.msra.mxu0 0.0
    %345 = vmatprep.subr.mxu0 0.0
    %346 = vmatpush2.msra.mxu0 0.0
    %347 = vmatprep.subr.mxu0 0.0
    %348 = vmatpush2.msra.mxu0 0.0
    %349 = vmatprep.subr.mxu0 0.0
    %350 = vmatpush2.msra.mxu0 0.0
    %351 = vmatprep.subr.mxu0 0.0
    %352 = vmatpush2.msra.mxu0 0.0
    %353 = vmatprep.subr.mxu0 0.0
    %354 = vmatpush2.msra.mxu0 0.0
    %355 = vmatprep.subr.mxu0 0.0
    %356 = vmatpush2.msra.mxu0 0.0
    %357 = vmatprep.subr.mxu0 0.0
    %358 = vmatpush2.msra.mxu0 0.0
    %359 = vmatprep.subr.mxu0 0.0
    %360 = vmatpush2.msra.mxu0 0.0
    %361 = vmatprep.subr.mxu0 0.0
    %362 = vmatpush2.msra.mxu0 0.0
    %363 = vmatprep.subr.mxu0 0.0
    %364 = vmatpush2.msra.mxu0 0.0
    %365 = vmatprep.mubr.f32.mxu0 0.0
    %366 = vmatmul.mubr.f32.gmra.mxu0 %v80
    %v367 = vpop.f32.mrf.mxu0
    %v368 = vadd.f32 0.0, %v367
    %v369 = vpop.f32.mrf.mxu0
    %370 = vdwg.mxu0
    %371 = vmatprep.subr.mxu0 0.0
    %372 = vmatpush1.msra.mxu0 %v284
    %373 = vmatprep.subr.mxu0 0.0
    %374 = vmatpush1.msra.mxu0 %v283
    %375 = vmatprep.subr.mxu0 0.0
    %376 = vmatpush1.msra.mxu0 %v282
    %377 = vmatprep.subr.mxu0 0.0
    %378 = vmatpush1.msra.mxu0 %v281
    %379 = vmatprep.subr.mxu0 0.0
    %380 = vmatpush1.msra.mxu0 %v280
    %381 = vmatprep.subr.mxu0 0.0
    %382 = vmatpush1.msra.mxu0 %v279
    %383 = vmatprep.subr.mxu0 0.0
    %384 = vmatpush1.msra.mxu0 %v278
    %385 = vmatprep.subr.mxu0 0.0
    %386 = vmatpush1.msra.mxu0 %v277
    %387 = vmatprep.subr.mxu0 0.0
    %388 = vmatpush1.msra.mxu0 %v276
    %389 = vmatprep.subr.mxu0 0.0
    %390 = vmatpush1.msra.mxu0 %v275
    %391 = vmatprep.subr.mxu0 0.0
    %392 = vmatpush1.msra.mxu0 %v274
    %393 = vmatprep.subr.mxu0 0.0
    %394 = vmatpush1.msra.mxu0 %v273
    %395 = vmatprep.subr.mxu0 0.0
    %396 = vmatpush1.msra.mxu0 %v272
    %397 = vmatprep.subr.mxu0 0.0
    %398 = vmatpush1.msra.mxu0 %v271
    %399 = vmatprep.subr.mxu0 0.0
    %400 = vmatpush1.msra.mxu0 %v270
    %401 = vmatprep.subr.mxu0 0.0
    %402 = vmatpush1.msra.mxu0 %v269
    %403 = vmatprep.subr.mxu0 0.0
    %404 = vmatpush2.msra.mxu0 0.0
    %405 = vmatprep.subr.mxu0 0.0
    %406 = vmatpush2.msra.mxu0 0.0
    %407 = vmatprep.subr.mxu0 0.0
    %408 = vmatpush2.msra.mxu0 0.0
    %409 = vmatprep.subr.mxu0 0.0
    %410 = vmatpush2.msra.mxu0 0.0
    %411 = vmatprep.subr.mxu0 0.0
    %412 = vmatpush2.msra.mxu0 0.0
    %413 = vmatprep.subr.mxu0 0.0
    %414 = vmatpush2.msra.mxu0 0.0
    %415 = vmatprep.subr.mxu0 0.0
    %416 = vmatpush2.msra.mxu0 0.0
    %417 = vmatprep.subr.mxu0 0.0
    %418 = vmatpush2.msra.mxu0 0.0
    %419 = vmatprep.subr.mxu0 0.0
    %420 = vmatpush2.msra.mxu0 0.0
    %421 = vmatprep.subr.mxu0 0.0
    %422 = vmatpush2.msra.mxu0 0.0
    %423 = vmatprep.subr.mxu0 0.0
    %424 = vmatpush2.msra.mxu0 0.0
    %425 = vmatprep.subr.mxu0 0.0
    %426 = vmatpush2.msra.mxu0 0.0
    %427 = vmatprep.subr.mxu0 0.0
    %428 = vmatpush2.msra.mxu0 0.0
    %429 = vmatprep.subr.mxu0 0.0
    %430 = vmatpush2.msra.mxu0 0.0
    %431 = vmatprep.subr.mxu0 0.0
    %432 = vmatpush2.msra.mxu0 0.0
    %433 = vmatprep.subr.mxu0 0.0
    %434 = vmatpush2.msra.mxu0 0.0
    %435 = vmatprep.mubr.f32.mxu0 0.0
    %436 = vmatmul.mubr.f32.gmra.mxu0 %v268
    %v437 = vpop.f32.mrf.mxu0
    %v438 = vadd.f32 %v368, %v437
    %v439 = vpop.f32.mrf.mxu0
    %440 = vdwg.mxu0
    %v441 = vld [vmem:[%s6] sm:$0x1]
    %v443 = vlaneseq
    %v444 = vshrl.u32 %v443, 7
    %v445 = vsub.s32 0, %v444
    %v446 = vrot.slane %v441, %v445
    %v448 = vadd.f32 %v438, %v446
    %449 = vst [vmem:[#allocation10] sm:$0xff] %v448
    // Predicated region
    $region46: #{tpu_custom_call.1} parent=1 // pred_check
      _
    $region47: #{tpu_custom_call.1} parent=1 // pred_check_branch
      %451 = sbr.rel (0) target = $region49
    $region48: #{tpu_custom_call.1} parent=1 // pred_region
      %s453 = ssub.s32 128, 128
      %454 = vsyncadd [#allocation4], %s453
      %s456 = sshll.u32 [#allocation10], 4
      %s457 = int_to_ptr.vmem [resolvable:$true] %s456
      %459 = dma.vmem_to_hbm [thread:$0]  %s457, 128, %s7, [#allocation4]
    $region49: #{tpu_custom_call.1} parent=1 // pred_fallthru
      _
    // Predicated region
    $region50: #{tpu_custom_call.1} parent=1 // pred_check
      _
    $region51: #{tpu_custom_call.1} parent=1 // pred_check_branch
      %461 = sbr.rel (0) target = $region53
    $region52: #{tpu_custom_call.1} parent=1 // pred_region
      %462 = dma.done [#allocation4], 128
    $region53: #{tpu_custom_call.1} parent=1 // pred_fallthru
      _
    %463 = vsyncpa [#allocation3], 1
    %464 = vsyncpa [#allocation6], 1
    %465 = vsyncpa [#allocation9], 1
    %466 = vsyncpa [#allocation4], 1

// kernel: tpu_custom_call.1
$region0: #{tpu_custom_call.1}
  #allocation0 [shape = 'u32[]', space=smem, size = 0x4, offset = 0x4, fixed_abs, tag = 'smem constant byte address 0x4 - core index']
  #allocation1 [shape = 'u32[144,128]{1,0:T(1,128)}', space=vmem, size = 0x12000, scoped, tag = 'internal scratch']
  %s0 = inlined_call_operand.hbm [shape: f32[8,128], index: 0, kind: input, shape index: {}]
  %s1 = inlined_call_operand.hbm [shape: f32[128,128], index: 1, kind: input, shape index: {}]
  %s2 = inlined_call_operand.vmem [shape: f32[1,128], index: 2, kind: input, shape index: {}]
  %s3 = inlined_call_operand.hbm [shape: f32[128,128], index: 3, kind: input, shape index: {}]
  %s4 = inlined_call_operand.vmem [shape: f32[1,128], index: 4, kind: input, shape index: {}]
  %s5 = inlined_call_operand.hbm [shape: f32[256,128], index: 5, kind: input, shape index: {}]
  %s6 = inlined_call_operand.vmem [shape: f32[1,128], index: 6, kind: input, shape index: {}]
  %s7 = inlined_call_operand.hbm [shape: f32[8,128], index: 7, kind: output, shape index: {}]
  %s8 = sld [smem:[#allocation0]]
  $region54: #{tpu_custom_call.1} parent=0
    _
  %s10 = ssub.s32 1, %s8
  %s11 = scalar_select 0, %s10, %s8
  $region1: #{tpu_custom_call.1} parent=0
    #allocation2 [shape = 'u8[4096]{0}', space=vmem, size = 0x1000, scoped, tag = 'input window, operand 0, single buffered']
    #allocation3 [shape = 's32[1]{0}', space=sflag, size = 0x4, scoped, tag = 'scoped memory for tpu_custom_call.1']
    #allocation4 [shape = 's32[1]{0}', space=sflag, size = 0x4, scoped, tag = 'scoped memory for tpu_custom_call.1']
    #allocation5 [shape = 'u8[65536]{0}', space=vmem, size = 0x10000, scoped, tag = 'input window, operand 1, single buffered']
    #allocation6 [shape = 's32[1]{0}', space=sflag, size = 0x4, scoped, tag = 'scoped memory for tpu_custom_call.1']
    #allocation7 [shape = 'u8[65536]{0}', space=vmem, size = 0x10000, scoped, tag = 'input window, operand 3, single buffered']
    #allocation8 [shape = 'u8[131072]{0}', space=vmem, size = 0x20000, scoped, tag = 'input window, operand 5, single buffered']
    #allocation9 [shape = 's32[1]{0}', space=sflag, size = 0x4, scoped, tag = 'scoped memory for tpu_custom_call.1']
    #allocation10 [shape = 'u8[4096]{0}', space=vmem, size = 0x1000, scoped, tag = 'output window, operand 0, single buffered']
    %12 = vsyncpa [#allocation3], 0
    %13 = vsyncpa [#allocation6], 0
    %14 = vsyncpa [#allocation9], 0
    %15 = vsyncpa [#allocation4], 0
    // Predicated region
    $region2: #{tpu_custom_call.1} parent=1 // pred_check
      _
    $region3: #{tpu_custom_call.1} parent=1 // pred_check_branch
      %17 = sbr.rel (0) target = $region5
    $region4: #{tpu_custom_call.1} parent=1 // pred_region
      %s19 = ssub.s32 128, 128
      %20 = vsyncadd [#allocation3], %s19
      %s22 = sshll.u32 [#allocation2], 4
      %s23 = int_to_ptr.vmem [resolvable:$true] %s22
      %25 = dma.hbm_to_vmem [thread:$0]  %s0, 128, %s23, [#allocation3]
    $region5: #{tpu_custom_call.1} parent=1 // pred_fallthru
      _
    // Predicated region
    $region6: #{tpu_custom_call.1} parent=1 // pred_check
      _
    $region7: #{tpu_custom_call.1} parent=1 // pred_check_branch
      %27 = sbr.rel (0) target = $region9
    $region8: #{tpu_custom_call.1} parent=1 // pred_region
      %s29 = ssub.s32 2048, 2048
      %30 = vsyncadd [#allocation6], %s29
      %s31 = sshll.u32 [#allocation5], 4
      %s32 = int_to_ptr.vmem [resolvable:$true] %s31
      %37 = dma.hbm_to_vmem [thread:$0]  %s1, 2048, %s32, [#allocation6], 128, 128, 8
    $region9: #{tpu_custom_call.1} parent=1 // pred_fallthru
      _
    // Predicated region
    $region10: #{tpu_custom_call.1} parent=1 // pred_check
      _
    $region11: #{tpu_custom_call.1} parent=1 // pred_check_branch
      %39 = sbr.rel (0) target = $region13
    $region12: #{tpu_custom_call.1} parent=1 // pred_region
      _
    $region13: #{tpu_custom_call.1} parent=1 // pred_fallthru
      _
    // Predicated region
    $region14: #{tpu_custom_call.1} parent=1 // pred_check
      _
    $region15: #{tpu_custom_call.1} parent=1 // pred_check_branch
      %41 = sbr.rel (0) target = $region17
    $region16: #{tpu_custom_call.1} parent=1 // pred_region
      %s43 = ssub.s32 2048, 2048
      %44 = vsyncadd [#allocation6], %s43
      %s45 = sshll.u32 [#allocation7], 4
      %s46 = int_to_ptr.vmem [resolvable:$true] %s45
      %51 = dma.hbm_to_vmem [thread:$0]  %s3, 2048, %s46, [#allocation6], 128, 128, 8
    $region17: #{tpu_custom_call.1} parent=1 // pred_fallthru
      _
    // Predicated region
    $region18: #{tpu_custom_call.1} parent=1 // pred_check
      _
    $region19: #{tpu_custom_call.1} parent=1 // pred_check_branch
      %53 = sbr.rel (0) target = $region21
    $region20: #{tpu_custom_call.1} parent=1 // pred_region
      _
    $region21: #{tpu_custom_call.1} parent=1 // pred_fallthru
      _
    // Predicated region
    $region22: #{tpu_custom_call.1} parent=1 // pred_check
      _
    $region23: #{tpu_custom_call.1} parent=1 // pred_check_branch
      %55 = sbr.rel (0) target = $region25
    $region24: #{tpu_custom_call.1} parent=1 // pred_region
      %s57 = ssub.s32 4096, 4096
      %58 = vsyncadd [#allocation9], %s57
      %s59 = sshll.u32 [#allocation8], 4
      %s60 = int_to_ptr.vmem [resolvable:$true] %s59
      %65 = dma.hbm_to_vmem [thread:$0]  %s5, 4096, %s60, [#allocation9], 128, 128, 8
    $region25: #{tpu_custom_call.1} parent=1 // pred_fallthru
      _
    // Predicated region
    $region26: #{tpu_custom_call.1} parent=1 // pred_check
      _
    $region27: #{tpu_custom_call.1} parent=1 // pred_check_branch
      %67 = sbr.rel (0) target = $region29
    $region28: #{tpu_custom_call.1} parent=1 // pred_region
      _
    $region29: #{tpu_custom_call.1} parent=1 // pred_fallthru
      _
    // Predicated region
    $region30: #{tpu_custom_call.1} parent=1 // pred_check
      _
    $region31: #{tpu_custom_call.1} parent=1 // pred_check_branch
      %69 = sbr.rel (0) target = $region33
    $region32: #{tpu_custom_call.1} parent=1 // pred_region
      %70 = dma.done [#allocation3], 128
    $region33: #{tpu_custom_call.1} parent=1 // pred_fallthru
      _
    // Predicated region
    $region34: #{tpu_custom_call.1} parent=1 // pred_check
      _
    $region35: #{tpu_custom_call.1} parent=1 // pred_check_branch
      %72 = sbr.rel (0) target = $region37
    $region36: #{tpu_custom_call.1} parent=1 // pred_region
      %73 = dma.done [#allocation6], 2048
    $region37: #{tpu_custom_call.1} parent=1 // pred_fallthru
      _
    // Predicated region
    $region38: #{tpu_custom_call.1} parent=1 // pred_check
      _
    $region39: #{tpu_custom_call.1} parent=1 // pred_check_branch
      %75 = sbr.rel (0) target = $region41
    $region40: #{tpu_custom_call.1} parent=1 // pred_region
      %76 = dma.done [#allocation6], 2048
    $region41: #{tpu_custom_call.1} parent=1 // pred_fallthru
      _
    // Predicated region
    $region42: #{tpu_custom_call.1} parent=1 // pred_check
      _
    $region43: #{tpu_custom_call.1} parent=1 // pred_check_branch
      %78 = sbr.rel (0) target = $region45
    $region44: #{tpu_custom_call.1} parent=1 // pred_region
      %79 = dma.done [#allocation9], 4096
    $region45: #{tpu_custom_call.1} parent=1 // pred_fallthru
      _
    %v80 = vld [vmem:[#allocation2] sm:$0xff]
    %v81 = vld [vmem:[#allocation5] sm:$0xff]
    %v82 = vld [vmem:[#allocation5 + $0x8] sm:$0xff]
    %v83 = vld [vmem:[#allocation5 + $0x10] sm:$0xff]
    %v84 = vld [vmem:[#allocation5 + $0x18] sm:$0xff]
    %v85 = vld [vmem:[#allocation5 + $0x20] sm:$0xff]
    %v86 = vld [vmem:[#allocation5 + $0x28] sm:$0xff]
    %v87 = vld [vmem:[#allocation5 + $0x30] sm:$0xff]
    %v88 = vld [vmem:[#allocation5 + $0x38] sm:$0xff]
    %v89 = vld [vmem:[#allocation5 + $0x40] sm:$0xff]
    %v90 = vld [vmem:[#allocation5 + $0x48] sm:$0xff]
    %v91 = vld [vmem:[#allocation5 + $0x50] sm:$0xff]
    %v92 = vld [vmem:[#allocation5 + $0x58] sm:$0xff]
    %v93 = vld [vmem:[#allocation5 + $0x60] sm:$0xff]
    %v94 = vld [vmem:[#allocation5 + $0x68] sm:$0xff]
    %v95 = vld [vmem:[#allocation5 + $0x70] sm:$0xff]
    %v96 = vld [vmem:[#allocation5 + $0x78] sm:$0xff]
    %v97 = vld [vmem:[%s2] sm:$0x1]
    %v99 = vlaneseq
    %v100 = vshrl.u32 %v99, 7
    %v101 = vsub.s32 0, %v100
    %v102 = vrot.slane %v97, %v101
    %104 = vmatprep.subr.mxu0 0.0
    %105 = vmatpush1.msra.mxu0 %v96
    %106 = vmatprep.subr.mxu0 0.0
    %107 = vmatpush1.msra.mxu0 %v95
    %108 = vmatprep.subr.mxu0 0.0
    %109 = vmatpush1.msra.mxu0 %v94
    %110 = vmatprep.subr.mxu0 0.0
    %111 = vmatpush1.msra.mxu0 %v93
    %112 = vmatprep.subr.mxu0 0.0
    %113 = vmatpush1.msra.mxu0 %v92
    %114 = vmatprep.subr.mxu0 0.0
    %115 = vmatpush1.msra.mxu0 %v91
    %116 = vmatprep.subr.mxu0 0.0
    %117 = vmatpush1.msra.mxu0 %v90
    %118 = vmatprep.subr.mxu0 0.0
    %119 = vmatpush1.msra.mxu0 %v89
    %120 = vmatprep.subr.mxu0 0.0
    %121 = vmatpush1.msra.mxu0 %v88
    %122 = vmatprep.subr.mxu0 0.0
    %123 = vmatpush1.msra.mxu0 %v87
    %124 = vmatprep.subr.mxu0 0.0
    %125 = vmatpush1.msra.mxu0 %v86
    %126 = vmatprep.subr.mxu0 0.0
    %127 = vmatpush1.msra.mxu0 %v85
    %128 = vmatprep.subr.mxu0 0.0
    %129 = vmatpush1.msra.mxu0 %v84
    %130 = vmatprep.subr.mxu0 0.0
    %131 = vmatpush1.msra.mxu0 %v83
    %132 = vmatprep.subr.mxu0 0.0
    %133 = vmatpush1.msra.mxu0 %v82
    %134 = vmatprep.subr.mxu0 0.0
    %135 = vmatpush1.msra.mxu0 %v81
    %136 = vmatprep.subr.mxu0 0.0
    %137 = vmatpush2.msra.mxu0 0.0
    %138 = vmatprep.subr.mxu0 0.0
    %139 = vmatpush2.msra.mxu0 0.0
    %140 = vmatprep.subr.mxu0 0.0
    %141 = vmatpush2.msra.mxu0 0.0
    %142 = vmatprep.subr.mxu0 0.0
    %143 = vmatpush2.msra.mxu0 0.0
    %144 = vmatprep.subr.mxu0 0.0
    %145 = vmatpush2.msra.mxu0 0.0
    %146 = vmatprep.subr.mxu0 0.0
    %147 = vmatpush2.msra.mxu0 0.0
    %148 = vmatprep.subr.mxu0 0.0
    %149 = vmatpush2.msra.mxu0 0.0
    %150 = vmatprep.subr.mxu0 0.0
    %151 = vmatpush2.msra.mxu0 0.0
    %152 = vmatprep.subr.mxu0 0.0
    %153 = vmatpush2.msra.mxu0 0.0
    %154 = vmatprep.subr.mxu0 0.0
    %155 = vmatpush2.msra.mxu0 0.0
    %156 = vmatprep.subr.mxu0 0.0
    %157 = vmatpush2.msra.mxu0 0.0
    %158 = vmatprep.subr.mxu0 0.0
    %159 = vmatpush2.msra.mxu0 0.0
    %160 = vmatprep.subr.mxu0 0.0
    %161 = vmatpush2.msra.mxu0 0.0
    %162 = vmatprep.subr.mxu0 0.0
    %163 = vmatpush2.msra.mxu0 0.0
    %164 = vmatprep.subr.mxu0 0.0
    %165 = vmatpush2.msra.mxu0 0.0
    %166 = vmatprep.subr.mxu0 0.0
    %167 = vmatpush2.msra.mxu0 0.0
    %168 = vmatprep.mubr.f32.mxu0 0.0
    %169 = vmatmul.mubr.f32.gmra.mxu0 %v80
    %v170 = vpop.f32.mrf.mxu0
    %v171 = vadd.f32 %v102, %v170
    %v172 = vpop.f32.mrf.mxu0
    %173 = vdwg.mxu0
    %v174 = vmax.f32 %v171, 0.0
    %v175 = vld [vmem:[#allocation7] sm:$0xff]
    %v176 = vld [vmem:[#allocation7 + $0x8] sm:$0xff]
    %v177 = vld [vmem:[#allocation7 + $0x10] sm:$0xff]
    %v178 = vld [vmem:[#allocation7 + $0x18] sm:$0xff]
    %v179 = vld [vmem:[#allocation7 + $0x20] sm:$0xff]
    %v180 = vld [vmem:[#allocation7 + $0x28] sm:$0xff]
    %v181 = vld [vmem:[#allocation7 + $0x30] sm:$0xff]
    %v182 = vld [vmem:[#allocation7 + $0x38] sm:$0xff]
    %v183 = vld [vmem:[#allocation7 + $0x40] sm:$0xff]
    %v184 = vld [vmem:[#allocation7 + $0x48] sm:$0xff]
    %v185 = vld [vmem:[#allocation7 + $0x50] sm:$0xff]
    %v186 = vld [vmem:[#allocation7 + $0x58] sm:$0xff]
    %v187 = vld [vmem:[#allocation7 + $0x60] sm:$0xff]
    %v188 = vld [vmem:[#allocation7 + $0x68] sm:$0xff]
    %v189 = vld [vmem:[#allocation7 + $0x70] sm:$0xff]
    %v190 = vld [vmem:[#allocation7 + $0x78] sm:$0xff]
    %v191 = vld [vmem:[%s4] sm:$0x1]
    %v193 = vlaneseq
    %v194 = vshrl.u32 %v193, 7
    %v195 = vsub.s32 0, %v194
    %v196 = vrot.slane %v191, %v195
    %198 = vmatprep.subr.mxu0 0.0
    %199 = vmatpush1.msra.mxu0 %v190
    %200 = vmatprep.subr.mxu0 0.0
    %201 = vmatpush1.msra.mxu0 %v189
    %202 = vmatprep.subr.mxu0 0.0
    %203 = vmatpush1.msra.mxu0 %v188
    %204 = vmatprep.subr.mxu0 0.0
    %205 = vmatpush1.msra.mxu0 %v187
    %206 = vmatprep.subr.mxu0 0.0
    %207 = vmatpush1.msra.mxu0 %v186
    %208 = vmatprep.subr.mxu0 0.0
    %209 = vmatpush1.msra.mxu0 %v185
    %210 = vmatprep.subr.mxu0 0.0
    %211 = vmatpush1.msra.mxu0 %v184
    %212 = vmatprep.subr.mxu0 0.0
    %213 = vmatpush1.msra.mxu0 %v183
    %214 = vmatprep.subr.mxu0 0.0
    %215 = vmatpush1.msra.mxu0 %v182
    %216 = vmatprep.subr.mxu0 0.0
    %217 = vmatpush1.msra.mxu0 %v181
    %218 = vmatprep.subr.mxu0 0.0
    %219 = vmatpush1.msra.mxu0 %v180
    %220 = vmatprep.subr.mxu0 0.0
    %221 = vmatpush1.msra.mxu0 %v179
    %222 = vmatprep.subr.mxu0 0.0
    %223 = vmatpush1.msra.mxu0 %v178
    %224 = vmatprep.subr.mxu0 0.0
    %225 = vmatpush1.msra.mxu0 %v177
    %226 = vmatprep.subr.mxu0 0.0
    %227 = vmatpush1.msra.mxu0 %v176
    %228 = vmatprep.subr.mxu0 0.0
    %229 = vmatpush1.msra.mxu0 %v175
    %230 = vmatprep.subr.mxu0 0.0
    %231 = vmatpush2.msra.mxu0 0.0
    %232 = vmatprep.subr.mxu0 0.0
    %233 = vmatpush2.msra.mxu0 0.0
    %234 = vmatprep.subr.mxu0 0.0
    %235 = vmatpush2.msra.mxu0 0.0
    %236 = vmatprep.subr.mxu0 0.0
    %237 = vmatpush2.msra.mxu0 0.0
    %238 = vmatprep.subr.mxu0 0.0
    %239 = vmatpush2.msra.mxu0 0.0
    %240 = vmatprep.subr.mxu0 0.0
    %241 = vmatpush2.msra.mxu0 0.0
    %242 = vmatprep.subr.mxu0 0.0
    %243 = vmatpush2.msra.mxu0 0.0
    %244 = vmatprep.subr.mxu0 0.0
    %245 = vmatpush2.msra.mxu0 0.0
    %246 = vmatprep.subr.mxu0 0.0
    %247 = vmatpush2.msra.mxu0 0.0
    %248 = vmatprep.subr.mxu0 0.0
    %249 = vmatpush2.msra.mxu0 0.0
    %250 = vmatprep.subr.mxu0 0.0
    %251 = vmatpush2.msra.mxu0 0.0
    %252 = vmatprep.subr.mxu0 0.0
    %253 = vmatpush2.msra.mxu0 0.0
    %254 = vmatprep.subr.mxu0 0.0
    %255 = vmatpush2.msra.mxu0 0.0
    %256 = vmatprep.subr.mxu0 0.0
    %257 = vmatpush2.msra.mxu0 0.0
    %258 = vmatprep.subr.mxu0 0.0
    %259 = vmatpush2.msra.mxu0 0.0
    %260 = vmatprep.subr.mxu0 0.0
    %261 = vmatpush2.msra.mxu0 0.0
    %262 = vmatprep.mubr.f32.mxu0 0.0
    %263 = vmatmul.mubr.f32.gmra.mxu0 %v174
    %v264 = vpop.f32.mrf.mxu0
    %v265 = vadd.f32 %v196, %v264
    %v266 = vpop.f32.mrf.mxu0
    %267 = vdwg.mxu0
    %v268 = vmax.f32 %v265, 0.0
    %v269 = vld [vmem:[#allocation8] sm:$0xff]
    %v270 = vld [vmem:[#allocation8 + $0x8] sm:$0xff]
    %v271 = vld [vmem:[#allocation8 + $0x10] sm:$0xff]
    %v272 = vld [vmem:[#allocation8 + $0x18] sm:$0xff]
    %v273 = vld [vmem:[#allocation8 + $0x20] sm:$0xff]
    %v274 = vld [vmem:[#allocation8 + $0x28] sm:$0xff]
    %v275 = vld [vmem:[#allocation8 + $0x30] sm:$0xff]
    %v276 = vld [vmem:[#allocation8 + $0x38] sm:$0xff]
    %v277 = vld [vmem:[#allocation8 + $0x40] sm:$0xff]
    %v278 = vld [vmem:[#allocation8 + $0x48] sm:$0xff]
    %v279 = vld [vmem:[#allocation8 + $0x50] sm:$0xff]
    %v280 = vld [vmem:[#allocation8 + $0x58] sm:$0xff]
    %v281 = vld [vmem:[#allocation8 + $0x60] sm:$0xff]
    %v282 = vld [vmem:[#allocation8 + $0x68] sm:$0xff]
    %v283 = vld [vmem:[#allocation8 + $0x70] sm:$0xff]
    %v284 = vld [vmem:[#allocation8 + $0x78] sm:$0xff]
    %v285 = vld [vmem:[#allocation8 + $0x80] sm:$0xff]
    %v286 = vld [vmem:[#allocation8 + $0x88] sm:$0xff]
    %v287 = vld [vmem:[#allocation8 + $0x90] sm:$0xff]
    %v288 = vld [vmem:[#allocation8 + $0x98] sm:$0xff]
    %v289 = vld [vmem:[#allocation8 + $0xa0] sm:$0xff]
    %v290 = vld [vmem:[#allocation8 + $0xa8] sm:$0xff]
    %v291 = vld [vmem:[#allocation8 + $0xb0] sm:$0xff]
    %v292 = vld [vmem:[#allocation8 + $0xb8] sm:$0xff]
    %v293 = vld [vmem:[#allocation8 + $0xc0] sm:$0xff]
    %v294 = vld [vmem:[#allocation8 + $0xc8] sm:$0xff]
    %v295 = vld [vmem:[#allocation8 + $0xd0] sm:$0xff]
    %v296 = vld [vmem:[#allocation8 + $0xd8] sm:$0xff]
    %v297 = vld [vmem:[#allocation8 + $0xe0] sm:$0xff]
    %v298 = vld [vmem:[#allocation8 + $0xe8] sm:$0xff]
    %v299 = vld [vmem:[#allocation8 + $0xf0] sm:$0xff]
    %v300 = vld [vmem:[#allocation8 + $0xf8] sm:$0xff]
    %301 = vmatprep.subr.mxu0 0.0
    %302 = vmatpush1.msra.mxu0 %v300
    %303 = vmatprep.subr.mxu0 0.0
    %304 = vmatpush1.msra.mxu0 %v299
    %305 = vmatprep.subr.mxu0 0.0
    %306 = vmatpush1.msra.mxu0 %v298
    %307 = vmatprep.subr.mxu0 0.0
    %308 = vmatpush1.msra.mxu0 %v297
    %309 = vmatprep.subr.mxu0 0.0
    %310 = vmatpush1.msra.mxu0 %v296
    %311 = vmatprep.subr.mxu0 0.0
    %312 = vmatpush1.msra.mxu0 %v295
    %313 = vmatprep.subr.mxu0 0.0
    %314 = vmatpush1.msra.mxu0 %v294
    %315 = vmatprep.subr.mxu0 0.0
    %316 = vmatpush1.msra.mxu0 %v293
    %317 = vmatprep.subr.mxu0 0.0
    %318 = vmatpush1.msra.mxu0 %v292
    %319 = vmatprep.subr.mxu0 0.0
    %320 = vmatpush1.msra.mxu0 %v291
    %321 = vmatprep.subr.mxu0 0.0
    %322 = vmatpush1.msra.mxu0 %v290
    %323 = vmatprep.subr.mxu0 0.0
    %324 = vmatpush1.msra.mxu0 %v289
    %325 = vmatprep.subr.mxu0 0.0
    %326 = vmatpush1.msra.mxu0 %v288
    %327 = vmatprep.subr.mxu0 0.0
    %328 = vmatpush1.msra.mxu0 %v287
    %329 = vmatprep.subr.mxu0 0.0
    %330 = vmatpush1.msra.mxu0 %v286
    %331 = vmatprep.subr.mxu0 0.0
    %332 = vmatpush1.msra.mxu0 %v285
    %333 = vmatprep.subr.mxu0 0.0
    %334 = vmatpush2.msra.mxu0 0.0
    %335 = vmatprep.subr.mxu0 0.0
    %336 = vmatpush2.msra.mxu0 0.0
    %337 = vmatprep.subr.mxu0 0.0
    %338 = vmatpush2.msra.mxu0 0.0
    %339 = vmatprep.subr.mxu0 0.0
    %340 = vmatpush2.msra.mxu0 0.0
    %341 = vmatprep.subr.mxu0 0.0
    %342 = vmatpush2.msra.mxu0 0.0
    %343 = vmatprep.subr.mxu0 0.0
    %344 = vmatpush2.msra.mxu0 0.0
    %345 = vmatprep.subr.mxu0 0.0
    %346 = vmatpush2.msra.mxu0 0.0
    %347 = vmatprep.subr.mxu0 0.0
    %348 = vmatpush2.msra.mxu0 0.0
    %349 = vmatprep.subr.mxu0 0.0
    %350 = vmatpush2.msra.mxu0 0.0
    %351 = vmatprep.subr.mxu0 0.0
    %352 = vmatpush2.msra.mxu0 0.0
    %353 = vmatprep.subr.mxu0 0.0
    %354 = vmatpush2.msra.mxu0 0.0
    %355 = vmatprep.subr.mxu0 0.0
    %356 = vmatpush2.msra.mxu0 0.0
    %357 = vmatprep.subr.mxu0 0.0
    %358 = vmatpush2.msra.mxu0 0.0
    %359 = vmatprep.subr.mxu0 0.0
    %360 = vmatpush2.msra.mxu0 0.0
    %361 = vmatprep.subr.mxu0 0.0
    %362 = vmatpush2.msra.mxu0 0.0
    %363 = vmatprep.subr.mxu0 0.0
    %364 = vmatpush2.msra.mxu0 0.0
    %365 = vmatprep.mubr.f32.mxu0 0.0
    %366 = vmatmul.mubr.f32.gmra.mxu0 %v80
    %v367 = vpop.f32.mrf.mxu0
    %v368 = vadd.f32 0.0, %v367
    %v369 = vpop.f32.mrf.mxu0
    %370 = vdwg.mxu0
    %371 = vmatprep.subr.mxu0 0.0
    %372 = vmatpush1.msra.mxu0 %v284
    %373 = vmatprep.subr.mxu0 0.0
    %374 = vmatpush1.msra.mxu0 %v283
    %375 = vmatprep.subr.mxu0 0.0
    %376 = vmatpush1.msra.mxu0 %v282
    %377 = vmatprep.subr.mxu0 0.0
    %378 = vmatpush1.msra.mxu0 %v281
    %379 = vmatprep.subr.mxu0 0.0
    %380 = vmatpush1.msra.mxu0 %v280
    %381 = vmatprep.subr.mxu0 0.0
    %382 = vmatpush1.msra.mxu0 %v279
    %383 = vmatprep.subr.mxu0 0.0
    %384 = vmatpush1.msra.mxu0 %v278
    %385 = vmatprep.subr.mxu0 0.0
    %386 = vmatpush1.msra.mxu0 %v277
    %387 = vmatprep.subr.mxu0 0.0
    %388 = vmatpush1.msra.mxu0 %v276
    %389 = vmatprep.subr.mxu0 0.0
    %390 = vmatpush1.msra.mxu0 %v275
    %391 = vmatprep.subr.mxu0 0.0
    %392 = vmatpush1.msra.mxu0 %v274
    %393 = vmatprep.subr.mxu0 0.0
    %394 = vmatpush1.msra.mxu0 %v273
    %395 = vmatprep.subr.mxu0 0.0
    %396 = vmatpush1.msra.mxu0 %v272
    %397 = vmatprep.subr.mxu0 0.0
    %398 = vmatpush1.msra.mxu0 %v271
    %399 = vmatprep.subr.mxu0 0.0
    %400 = vmatpush1.msra.mxu0 %v270
    %401 = vmatprep.subr.mxu0 0.0
    %402 = vmatpush1.msra.mxu0 %v269
    %403 = vmatprep.subr.mxu0 0.0
    %404 = vmatpush2.msra.mxu0 0.0
    %405 = vmatprep.subr.mxu0 0.0
    %406 = vmatpush2.msra.mxu0 0.0
    %407 = vmatprep.subr.mxu0 0.0
    %408 = vmatpush2.msra.mxu0 0.0
    %409 = vmatprep.subr.mxu0 0.0
    %410 = vmatpush2.msra.mxu0 0.0
    %411 = vmatprep.subr.mxu0 0.0
    %412 = vmatpush2.msra.mxu0 0.0
    %413 = vmatprep.subr.mxu0 0.0
    %414 = vmatpush2.msra.mxu0 0.0
    %415 = vmatprep.subr.mxu0 0.0
    %416 = vmatpush2.msra.mxu0 0.0
    %417 = vmatprep.subr.mxu0 0.0
    %418 = vmatpush2.msra.mxu0 0.0
    %419 = vmatprep.subr.mxu0 0.0
    %420 = vmatpush2.msra.mxu0 0.0
    %421 = vmatprep.subr.mxu0 0.0
    %422 = vmatpush2.msra.mxu0 0.0
    %423 = vmatprep.subr.mxu0 0.0
    %424 = vmatpush2.msra.mxu0 0.0
    %425 = vmatprep.subr.mxu0 0.0
    %426 = vmatpush2.msra.mxu0 0.0
    %427 = vmatprep.subr.mxu0 0.0
    %428 = vmatpush2.msra.mxu0 0.0
    %429 = vmatprep.subr.mxu0 0.0
    %430 = vmatpush2.msra.mxu0 0.0
    %431 = vmatprep.subr.mxu0 0.0
    %432 = vmatpush2.msra.mxu0 0.0
    %433 = vmatprep.subr.mxu0 0.0
    %434 = vmatpush2.msra.mxu0 0.0
    %435 = vmatprep.mubr.f32.mxu0 0.0
    %436 = vmatmul.mubr.f32.gmra.mxu0 %v268
    %v437 = vpop.f32.mrf.mxu0
    %v438 = vadd.f32 %v368, %v437
    %v439 = vpop.f32.mrf.mxu0
    %440 = vdwg.mxu0
    %v441 = vld [vmem:[%s6] sm:$0x1]
    %v443 = vlaneseq
    %v444 = vshrl.u32 %v443, 7
    %v445 = vsub.s32 0, %v444
    %v446 = vrot.slane %v441, %v445
    %v448 = vadd.f32 %v438, %v446
    %449 = vst [vmem:[#allocation10] sm:$0xff] %v448
    // Predicated region
    $region46: #{tpu_custom_call.1} parent=1 // pred_check
      _
    $region47: #{tpu_custom_call.1} parent=1 // pred_check_branch
      %451 = sbr.rel (0) target = $region49
    $region48: #{tpu_custom_call.1} parent=1 // pred_region
      %s453 = ssub.s32 128, 128
      %454 = vsyncadd [#allocation4], %s453
      %s456 = sshll.u32 [#allocation10], 4
      %s457 = int_to_ptr.vmem [resolvable:$true] %s456
      %459 = dma.vmem_to_hbm [thread:$0]  %s457, 128, %s7, [#allocation4]
    $region49: #{tpu_custom_call.1} parent=1 // pred_fallthru
      _
    // Predicated region
    $region50: #{tpu_custom_call.1} parent=1 // pred_check
      _
    $region51: #{tpu_custom_call.1} parent=1 // pred_check_branch
      %461 = sbr.rel (0) target = $region53
    $region52: #{tpu_custom_call.1} parent=1 // pred_region
      %462 = dma.done [#allocation4], 128
    $region53: #{tpu_custom_call.1} parent=1 // pred_fallthru
      _
    %463 = vsyncpa [#allocation3], 1
    %464 = vsyncpa [#allocation6], 1
    %465 = vsyncpa [#allocation9], 1
    %466 = vsyncpa [#allocation4], 1

</llo_original>
